<compile_context>
chip_gen: v7x
topology: tpu7x:2x2x1
jax: 0.10.0
libtpu: 0.0.40
codegen_flags: <defaults>
</compile_context>

<pallas_src>
import jax
import jax.numpy as jnp
from jax.experimental import pallas as pl
from jax.experimental.pallas import tpu as pltpu


def labelnorm_kernel(label_ref, bias_ref, x_ref, o_ref):
    # label_ref: SMEM (B,) int32 scalar-prefetch; consumed by the bias
    #            index_map, unused in the body.
    # bias_ref : VMEM (1, C, 1)        -- embedding row for this batch element
    # x_ref    : VMEM (1, C, HW_TILE)
    # o_ref    : VMEM (1, C, HW_TILE)  -- aliases x in HBM (in-place add)
    del label_ref
    o_ref[...] = x_ref[...] + bias_ref[...]   # (1,C,1) broadcasts over lanes


def _pick_hw_tile(hw, c, itemsize, cap_bytes=4 * 1024 * 1024):
    """Largest lane tile (multiple of 128 dividing hw) whose block fits cap."""
    if hw * c * itemsize <= cap_bytes or hw <= 128:
        return hw
    best = hw
    t = 128
    while t <= hw:
        if hw % t == 0 and t * c * itemsize <= cap_bytes:
            best = t
        t += 128
    return best


def label_norm(x_nchw, label, bias_table):
    """x_nchw: (B,C,H,W) f32, label: (B,) int, bias_table: (2,C) f32."""
    B, C, H, W = x_nchw.shape
    HW = H * W

    # Free views (no data movement): NCHW -> (B, C, H*W); bias -> (2, C, 1).
    x = x_nchw.reshape(B, C, HW)
    bias3 = bias_table.reshape(bias_table.shape[0], C, 1)

    hw_tile = _pick_hw_tile(HW, C, x.dtype.itemsize)
    n_hw = HW // hw_tile

    out = pl.pallas_call(
        labelnorm_kernel,
        out_shape=jax.ShapeDtypeStruct((B, C, HW), x.dtype),
        grid_spec=pltpu.PrefetchScalarGridSpec(
            num_scalar_prefetch=1,            # label -> SMEM
            grid=(B, n_hw),
            in_specs=[
                # label-selected embedding row, picked in the index_map
                pl.BlockSpec((1, C, 1), lambda b, t, lab: (lab[b], 0, 0)),
                # one (batch, hw-tile) block of x per grid step
                pl.BlockSpec((1, C, hw_tile), lambda b, t, lab: (b, 0, t)),
            ],
            out_specs=pl.BlockSpec((1, C, hw_tile), lambda b, t, lab: (b, 0, t)),
        ),
        # call args are (label, bias3, x) -> alias x (index 2) to output 0:
        # the add is done in place, no extra output HBM allocation/pass.
        input_output_aliases={2: 0},
        compiler_params=pltpu.CompilerParams(
            dimension_semantics=("parallel", "parallel")),
    )(label.astype(jnp.int32), bias3, x)

    return out.reshape(B, C, H, W)            # free view back to NCHW


if __name__ == "__main__":
    B, C, H, W = 2, 4, 16, 16
    key = jax.random.PRNGKey(0)
    kx, kb = jax.random.split(key)

    x = jax.random.normal(kx, (B, C, H, W), dtype=jnp.float32)
    label = jnp.array([0, 1], dtype=jnp.int32)
    # nn.Embedding(2, c) default init: N(0, 1)
    bias_table = jax.random.normal(kb, (2, C), dtype=jnp.float32)

    # pure-JAX reference (computed before the kernel since x is aliased in place)
    ref = x + bias_table[label][:, :, None, None]

    out = jax.block_until_ready(label_norm(x, label, bias_table))

    assert out.shape == (B, C, H, W)
    assert jnp.allclose(out, ref, atol=1e-6), "mismatch vs reference"
    print("KERNEL_OK")
</pallas_src>

<mosaic_0001>
module attributes {stable_mosaic.version = 11 : i64} {
  func.func @labelnorm_kernel(%arg0: i32, %arg1: i32, %arg2: memref<2xi32, #tpu.memory_space<smem>>, %arg3: memref<1x4x1xf32, #tpu.memory_space<vmem>>, %arg4: memref<1x4x256xf32, #tpu.memory_space<vmem>>, %arg5: memref<1x4x256xf32, #tpu.memory_space<vmem>>) attributes {dimension_semantics = [#tpu.dimension_semantics<parallel>, #tpu.dimension_semantics<parallel>], iteration_bounds = array<i64: 2, 1>, scalar_prefetch = 1 : i64, scratch_operands = 0 : i64, tpu.core_type = #tpu.core_type<tc>, window_params = [{transform_indices = @transform_0, window_bounds = array<i64: 1, 4, 1>}, {transform_indices = @transform_1, window_bounds = array<i64: 1, 4, 256>}, {transform_indices = @transform_2, window_bounds = array<i64: 1, 4, 256>}]} {
    %c0 = arith.constant 0 : index
    %c0_0 = arith.constant 0 : index
    %c0_1 = arith.constant 0 : index
    %0 = vector.load %arg4[%c0, %c0_0, %c0_1] : memref<1x4x256xf32, #tpu.memory_space<vmem>>, vector<1x4x256xf32>
    %c0_2 = arith.constant 0 : index
    %c0_3 = arith.constant 0 : index
    %c0_4 = arith.constant 0 : index
    %1 = vector.load %arg3[%c0_2, %c0_3, %c0_4] : memref<1x4x1xf32, #tpu.memory_space<vmem>>, vector<1x4x1xf32>
    %2 = vector.broadcast %1 : vector<1x4x1xf32> to vector<1x4x256xf32>
    %3 = arith.addf %0, %2 : vector<1x4x256xf32>
    %c0_5 = arith.constant 0 : index
    %c0_6 = arith.constant 0 : index
    %c0_7 = arith.constant 0 : index
    %4 = vector.load %arg5[%c0_5, %c0_6, %c0_7] : memref<1x4x256xf32, #tpu.memory_space<vmem>>, vector<1x4x256xf32>
    tpu.vector_store %arg5[%c0_5, %c0_6, %c0_7], %3 {strides = array<i32>} : memref<1x4x256xf32, #tpu.memory_space<vmem>>, vector<1x4x256xf32>,
    return
  }
  func.func @transform_0(%arg0: i32, %arg1: i32, %arg2: memref<2xi32, #tpu.memory_space<smem>>) -> (i32, i32, i32) {
    %0 = arith.index_cast %arg0 : i32 to index
    %1 = memref.load %arg2[%0] : memref<2xi32, #tpu.memory_space<smem>>
    %c0_i32 = arith.constant 0 : i32
    %c0_i32_0 = arith.constant 0 : i32
    %c0_i32_1 = arith.constant 0 : i32
    return %1, %c0_i32, %c0_i32_0 : i32, i32, i32
  }
  func.func @transform_1(%arg0: i32, %arg1: i32, %arg2: memref<2xi32, #tpu.memory_space<smem>>) -> (i32, i32, i32) {
    %c0_i32 = arith.constant 0 : i32
    %c0_i32_0 = arith.constant 0 : i32
    return %arg0, %c0_i32, %arg1 : i32, i32, i32
  }
  func.func @transform_2(%arg0: i32, %arg1: i32, %arg2: memref<2xi32, #tpu.memory_space<smem>>) -> (i32, i32, i32) {
    %c0_i32 = arith.constant 0 : i32
    %c0_i32_0 = arith.constant 0 : i32
    return %arg0, %c0_i32, %arg1 : i32, i32, i32
  }
}

</mosaic_0001>

<llo_original>
// kernel: tpu_custom_call.1
$region0: #{tpu_custom_call.1}
  #allocation0 [shape = 'u32[]', space=smem, size = 0x4, offset = 0x4, fixed_abs, tag = 'smem constant byte address 0x4 - core index']
  #allocation1 [shape = 'u32[144,128]{1,0:T(1,128)}', space=vmem, size = 0x12000, scoped, tag = 'internal scratch']
  #allocation2 [shape = 's32[1]{0}', space=sflag, size = 0x4, scoped, tag = 'scoped memory for tpu_custom_call.1']
  #allocation3 [shape = 'u8[512]{0}', space=smem, size = 0x200, scoped, tag = 'prefetched SMEM operand 0']
  %s0 = inlined_call_operand.vmem [shape: s32[2], index: 0, kind: input, shape index: {}]
  %s1 = inlined_call_operand.vmem [shape: f32[2,4,1], index: 1, kind: input, shape index: {}]
  %s2 = inlined_call_operand.hbm [shape: f32[2,4,256], index: 2, kind: input, shape index: {}, may-alias: {2,3}]
  %s3 = inlined_call_operand.hbm [shape: f32[2,4,256], index: 3, kind: output, shape index: {}, may-alias: {2,3}]
  %s4 = sld [smem:[#allocation0]]
  $region45: #{tpu_custom_call.1} parent=0
    _
  %s6 = ssub.s32 1, %s4
  %s7 = scalar_select 0, %s6, %s4
  %s8 = sshll.u32 %s0, 4
  %s9 = int_to_ptr.vmem [resolvable:$true] %s8
  %11 = dma.vmem_to_smem %s9, 16, [#allocation3], [#allocation2]
  %12 = dma.done [#allocation2], 16
  %13 = sfence
  $region1: #{tpu_custom_call.1} parent=0
    #allocation4 [shape = 'u8[8192]{0}', space=vmem, size = 0x2000, scoped, tag = 'input window, operand 2']
    #allocation5 [shape = 's32[2]{0}', space=sflag, size = 0x8, scoped, tag = 'scoped memory for tpu_custom_call.1']
    #allocation6 [shape = 's32[2]{0}', space=sflag, size = 0x8, scoped, tag = 'scoped memory for tpu_custom_call.1']
    #allocation7 [shape = 'u8[8192]{0}', space=vmem, size = 0x2000, scoped, tag = 'output window, operand 0']
    %14 = vsyncpa [#allocation5], 0
    %s15 = scalar_lea.sflag [#allocation5], 1
    %16 = vsyncpa %s15, 0
    %17 = vsyncpa [#allocation6], 0
    %s18 = scalar_lea.sflag [#allocation6], 1
    %19 = vsyncpa %s18, 0
    loop: start=0, step=1, limit=4
    $region2: #{tpu_custom_call.1} parent=1 // loop_pre_header
      _
    $region3: #{tpu_custom_call.1} parent=1 // loop_header
      %s21 = sphi 0, %s25
      %p22 = scmp.ge.s32.totalorder %s21, 4
      %s28 = sphi 0, %s40
      %s29 = sphi 0, %s36
      %s30 = sphi 0, %s28
      %s31 = sphi 0, %s29
      %s32 = sphi 0, %s30
      %s33 = sphi 0, %s31
      %s45 = sphi 0, %s47
      %s48 = sphi 0, %s45
      %s49 = sphi 0, %s48
      %s65 = sphi 0, %s49
      %s73 = sphi 0, %s75
      %s76 = sphi 0, %s73
      %s77 = sphi 0, %s76
      %s93 = sphi 0, %s77
      %s101 = sphi 0, %s103
      %s104 = sphi 0, %s101
      %s105 = sphi 0, %s104
      %s121 = sphi 0, %s105
    $region4: #{tpu_custom_call.1} parent=1 // loop_header_branch
      %24 = sbr.rel (%p22) target = $region8
    $region5: #{tpu_custom_call.1} parent=1 // loop_body
      %s26 = ssub.s32 %s21, 1
      %s27 = ssub.s32 %s21, 2
      %s34 = sadd.s32 1, %s29
      %p35 = scmp.ge.s32.totalorder %s34, 1
      %s36 = scalar_select %p35, 0, %s34
      %s37 = sadd.s32 1, %s28
      %s38 = scalar_select %p35, %s37, %s28
      %p39 = scmp.ge.s32.totalorder %s38, 2
      %s40 = scalar_select %p39, 0, %s38
      %s41 = sld [smem:[#allocation3 + %s28]]
      %s42 = sld [smem:[#allocation3 + %s40]]
      %s43 = ssub.s32 %s41, %s42
      %p44 = scmp.eq.s32.totalorder %s43, 0
      %s46 = sadd.s32 %s45, 1
      %s47 = scalar_select %p44, %s45, %s46
      %p50 = pneg %p44
      %p51 = scmp.eq.s32.totalorder %s21, 1
      %p52 = por %p50, %p51
      %p53 = scmp.ne.s32.totalorder %s45, %s48
      %p54 = scmp.eq.s32.totalorder %s21, 0
      %p55 = por %p53, %p54
      %p56 = scmp.ne.s32.totalorder %s45, %s48
      %p57 = scmp.eq.s32.totalorder %s26, 1
      %p58 = por %p56, %p57
      %p59 = scmp.ne.s32.totalorder %s48, %s49
      %p60 = scmp.eq.s32.totalorder %s26, 0
      %p61 = por %p59, %p60
      %p62 = scmp.ne.s32.totalorder %s48, %s49
      %p63 = scmp.eq.s32.totalorder %s27, 1
      %p64 = por %p62, %p63
      %p66 = scmp.ne.s32.totalorder %s49, %s65
      %p67 = scmp.eq.s32.totalorder %s27, 0
      %p68 = por %p66, %p67
      %s69 = ssub.s32 %s28, %s40
      %s70 = ssub.s32 %s29, %s36
      %s71 = sor.u32 %s69, %s70
      %p72 = scmp.eq.s32.totalorder %s71, 0
      %s74 = sadd.s32 %s73, 1
      %s75 = scalar_select %p72, %s73, %s74
      %p78 = pneg %p72
      %p79 = scmp.eq.s32.totalorder %s21, 1
      %p80 = por %p78, %p79
      %p81 = scmp.ne.s32.totalorder %s73, %s76
      %p82 = scmp.eq.s32.totalorder %s21, 0
      %p83 = por %p81, %p82
      %p84 = scmp.ne.s32.totalorder %s73, %s76
      %p85 = scmp.eq.s32.totalorder %s26, 1
      %p86 = por %p84, %p85
      %p87 = scmp.ne.s32.totalorder %s76, %s77
      %p88 = scmp.eq.s32.totalorder %s26, 0
      %p89 = por %p87, %p88
      %p90 = scmp.ne.s32.totalorder %s76, %s77
      %p91 = scmp.eq.s32.totalorder %s27, 1
      %p92 = por %p90, %p91
      %p94 = scmp.ne.s32.totalorder %s77, %s93
      %p95 = scmp.eq.s32.totalorder %s27, 0
      %p96 = por %p94, %p95
      %s97 = ssub.s32 %s28, %s40
      %s98 = ssub.s32 %s29, %s36
      %s99 = sor.u32 %s97, %s98
      %p100 = scmp.eq.s32.totalorder %s99, 0
      %s102 = sadd.s32 %s101, 1
      %s103 = scalar_select %p100, %s101, %s102
      %p106 = pneg %p100
      %p107 = scmp.eq.s32.totalorder %s21, 1
      %p108 = por %p106, %p107
      %p109 = scmp.ne.s32.totalorder %s101, %s104
      %p110 = scmp.eq.s32.totalorder %s21, 0
      %p111 = por %p109, %p110
      %p112 = scmp.ne.s32.totalorder %s101, %s104
      %p113 = scmp.eq.s32.totalorder %s26, 1
      %p114 = por %p112, %p113
      %p115 = scmp.ne.s32.totalorder %s104, %s105
      %p116 = scmp.eq.s32.totalorder %s26, 0
      %p117 = por %p115, %p116
      %p118 = scmp.ne.s32.totalorder %s104, %s105
      %p119 = scmp.eq.s32.totalorder %s27, 1
      %p120 = por %p118, %p119
      %p122 = scmp.ne.s32.totalorder %s105, %s121
      %p123 = scmp.eq.s32.totalorder %s27, 0
      %p124 = por %p122, %p123
      %p125 = scmp.le.s32.totalorder 1, %s21
      %p126 = scmp.lt.s32.totalorder %s21, 3
      %p127 = pnand %p125, %p126
      %p128 = pneg %p127
      // Predicated region
      $region9: #{tpu_custom_call.1} parent=5 // pred_check
        _
      $region10: #{tpu_custom_call.1} parent=5 // pred_check_branch
        %130 = sbr.rel (%p127) target = $region12
      $region11: #{tpu_custom_call.1} parent=5 // pred_region
        %s131 = ssub.s32 %s21, 1
      $region12: #{tpu_custom_call.1} parent=5 // pred_fallthru
        _
      %p132 = scmp.lt.s32.totalorder %s21, 2
      // Predicated region
      $region13: #{tpu_custom_call.1} parent=5 // pred_check
        %p133 = pneg %p132
      $region14: #{tpu_custom_call.1} parent=5 // pred_check_branch
        %135 = sbr.rel (%p133) target = $region16
      $region15: #{tpu_custom_call.1} parent=5 // pred_region
        // Predicated region
        $region17: #{tpu_custom_call.1} parent=15 // pred_check
          %p136 = pneg %p55
        $region18: #{tpu_custom_call.1} parent=15 // pred_check_branch
          %138 = sbr.rel (%p136) target = $region20
        $region19: #{tpu_custom_call.1} parent=15 // pred_region
          %s139 = sld [smem:[#allocation3 + %s28]]
          %p140 = scmp.lt.s32.totalorder %s139, 1
          %s141 = scalar_select %p140, %s139, 1
          %s142 = smul.addr %s141, 4
          %s143 = scalar_lea.vmem %s1, %s142
          %s144 = sld [smem:[#allocation3 + %s28]]
        $region20: #{tpu_custom_call.1} parent=15 // pred_fallthru
          _
        // Predicated region
        $region21: #{tpu_custom_call.1} parent=15 // pred_check
          %p145 = pneg %p83
        $region22: #{tpu_custom_call.1} parent=15 // pred_check_branch
          %147 = sbr.rel (%p145) target = $region24
        $region23: #{tpu_custom_call.1} parent=15 // pred_region
          %s148 = sand.u32 %s73, 1
          %s149 = scalar_lea.sflag [#allocation5], %s148
          %s150 = sand.u32 %s73, 1
          %s151 = smul.addr %s150, 8
          %s152 = scalar_lea.vmem [#allocation4], %s151
          %s153 = smul.u32 2, %s29
          %s155 = ssub.s32 128, 128
          %156 = vsyncadd %s149, %s155
          %s157 = smul.addr %s28, 2
          %s158 = sadd.s32 %s153, %s157
          %s159 = smul.addr %s158, 64
          %s160 = scalar_lea.hbm %s2, %s159
          %s162 = sshll.u32 %s152, 4
          %s163 = int_to_ptr.vmem [resolvable:$true] %s162
          %165 = dma.hbm_to_vmem [thread:$0]  %s160, 128, %s163, %s149
        $region24: #{tpu_custom_call.1} parent=15 // pred_fallthru
          _
      $region16: #{tpu_custom_call.1} parent=5 // pred_fallthru
        _
      %p166 = scmp.le.s32.totalorder 1, %s21
      %p167 = scmp.lt.s32.totalorder %s21, 3
      %p168 = pnand %p166, %p167
      %p169 = pneg %p168
      // Predicated region
      $region25: #{tpu_custom_call.1} parent=5 // pred_check
        _
      $region26: #{tpu_custom_call.1} parent=5 // pred_check_branch
        %171 = sbr.rel (%p168) target = $region28
      $region27: #{tpu_custom_call.1} parent=5 // pred_region
        %s172 = ssub.s32 %s21, 1
        %s173 = sand.u32 %s76, 1
        %s174 = scalar_lea.sflag [#allocation5], %s173
        %s175 = sand.u32 %s76, 1
        %s176 = smul.addr %s175, 8
        %s177 = scalar_lea.vmem [#allocation4], %s176
        // Predicated region
        $region29: #{tpu_custom_call.1} parent=27 // pred_check
          %p178 = pneg %p89
        $region30: #{tpu_custom_call.1} parent=27 // pred_check_branch
          %180 = sbr.rel (%p178) target = $region32
        $region31: #{tpu_custom_call.1} parent=27 // pred_region
          %181 = dma.done %s174, 128
        $region32: #{tpu_custom_call.1} parent=27 // pred_fallthru
          _
        %s182 = sld [smem:[#allocation3 + %s30]]
        %p183 = scmp.lt.s32.totalorder %s182, 1
        %s184 = scalar_select %p183, %s182, 1
        %s185 = smul.addr %s184, 4
        %s186 = scalar_lea.vmem %s1, %s185
        %p187 = pneg %p61
        %p188 = pneg %p58
        %s189 = sand.u32 %s76, 1
        %s190 = scalar_lea.sflag [#allocation5], %s189
        %s191 = sand.u32 %s76, 1
        %s192 = smul.addr %s191, 8
        %s193 = scalar_lea.vmem [#allocation4], %s192
        %p194 = pneg %p89
        %p195 = pneg %p86
        %p196 = pneg %p117
        %p197 = pneg %p114
        %s198 = sand.u32 %s104, 1
        %s199 = scalar_lea.sflag [#allocation6], %s198
        %s200 = sand.u32 %s104, 1
        %s201 = smul.addr %s200, 8
        %s202 = scalar_lea.vmem [#allocation7], %s201
        %s203 = sld [smem:[#allocation3 + %s30]]
        %p204 = scmp.lt.s32.totalorder %s203, 1
        %s205 = scalar_select %p204, %s203, 1
        %s206 = smul.addr %s205, 4
        %s207 = scalar_lea.vmem %s1, %s206
        %s208 = sld [smem:[#allocation3 + %s30]]
        %s209 = smul.u32 2, %s31
        %s210 = smul.u32 2, %s31
        %v211 = vld [vmem:[%s177] sm:$0xff]
        %v212 = vld [vmem:[%s207] sm:$0xf]
        %214 = vset.pattern.permute.xlu0 0
        %215 = vperm.xlu0 %214, %v212
        %v216 = vpop.permute.xlu0 %215
        %v218 = vunpack.c.l.s4 839922192
        %v219 = vunpack.c.0.s8 %v218
        %v220 = vlaneseq
        %v221 = vshrl.u32 %v220, 7
        %v222 = vsub.s32 %v219, %v221
        %v223 = vrot.slane %v216, %v222
        %v225 = vadd.f32 %v211, %v223
        %226 = vst [vmem:[%s202] sm:$0xff] %v225
        %s227 = sand.u32 %s104, 1
        %s228 = scalar_lea.sflag [#allocation6], %s227
        %s229 = sand.u32 %s104, 1
        %s230 = smul.addr %s229, 8
        %s231 = scalar_lea.vmem [#allocation7], %s230
        // Predicated region
        $region33: #{tpu_custom_call.1} parent=27 // pred_check
          %p232 = pneg %p114
        $region34: #{tpu_custom_call.1} parent=27 // pred_check_branch
          %234 = sbr.rel (%p232) target = $region36
        $region35: #{tpu_custom_call.1} parent=27 // pred_region
          %s235 = smul.u32 2, %s31
          %s237 = ssub.s32 128, 128
          %238 = vsyncadd %s228, %s237
          %s239 = smul.addr %s30, 2
          %s240 = sadd.s32 %s235, %s239
          %s241 = smul.addr %s240, 64
          %s242 = scalar_lea.hbm %s3, %s241
          %s244 = sshll.u32 %s231, 4
          %s245 = int_to_ptr.vmem [resolvable:$true] %s244
          %247 = dma.vmem_to_hbm [thread:$0]  %s245, 128, %s242, %s228
        $region36: #{tpu_custom_call.1} parent=27 // pred_fallthru
          _
      $region28: #{tpu_custom_call.1} parent=5 // pred_fallthru
        _
      %p248 = scmp.le.s32.totalorder 2, %s21
      // Predicated region
      $region37: #{tpu_custom_call.1} parent=5 // pred_check
        %p249 = pneg %p248
      $region38: #{tpu_custom_call.1} parent=5 // pred_check_branch
        %251 = sbr.rel (%p249) target = $region40
      $region39: #{tpu_custom_call.1} parent=5 // pred_region
        %s252 = ssub.s32 %s21, 2
        // Predicated region
        $region41: #{tpu_custom_call.1} parent=39 // pred_check
          %p253 = pneg %p120
        $region42: #{tpu_custom_call.1} parent=39 // pred_check_branch
          %255 = sbr.rel (%p253) target = $region44
        $region43: #{tpu_custom_call.1} parent=39 // pred_region
          %s256 = sand.u32 %s105, 1
          %s257 = scalar_lea.sflag [#allocation6], %s256
          %s258 = sand.u32 %s105, 1
          %s259 = smul.addr %s258, 8
          %s260 = scalar_lea.vmem [#allocation7], %s259
          %261 = dma.done %s257, 128
        $region44: #{tpu_custom_call.1} parent=39 // pred_fallthru
          _
      $region40: #{tpu_custom_call.1} parent=5 // pred_fallthru
        _
    $region6: #{tpu_custom_call.1} parent=1 // loop_footer
      %s25 = sadd.s32 1, %s21
    $region7: #{tpu_custom_call.1} parent=1 // loop_footer_branch
      %20 = sbr.rel target = $region3
    $region8: #{tpu_custom_call.1} parent=1 // loop_exit
      _
    %262 = vsyncpa [#allocation5], 1
    %s263 = scalar_lea.sflag [#allocation5], 1
    %264 = vsyncpa %s263, 1
    %265 = vsyncpa [#allocation6], 1
    %s266 = scalar_lea.sflag [#allocation6], 1
    %267 = vsyncpa %s266, 1

</llo_original>
